<compile_context>
chip_gen: v7x
topology: tpu7x:2x2x1
jax: 0.10.0
libtpu: 0.0.40
codegen_flags: <defaults>
</compile_context>

<pallas_src>
import functools
import math

import jax
import jax.numpy as jnp
from jax.experimental import pallas as pl
from jax.experimental.pallas import tpu as pltpu


# ---------------------------------------------------------------------------
# Synthetic stand-in for the StyleGAN2-ADA target-shape tables.
# TODO(synk): the real shape table comes from the pretrained StyleGAN2-ADA generator;
# small deterministic stand-in shapes are used here.
STYLEGAN2_ADA_CONV_WEIGHT_WITHOUT_BIAS_SHAPES = {
    "b4.conv1.weight": (4, 4, 3, 3),
    "b8.conv0.weight": (4, 4, 3, 3),
    "b8.conv1.weight": (4, 4, 3, 3),
    "b16.conv0.weight": (4, 4, 3, 3),
    "b16.conv1.weight": (4, 4, 3, 3),
    "b32.conv0.weight": (4, 4, 3, 3),  # filtered out when output_size == 16
    "b32.conv1.weight": (4, 4, 3, 3),  # filtered out when output_size == 16
}


def get_target_shapes(opts):
    general_shape = STYLEGAN2_ADA_CONV_WEIGHT_WITHOUT_BIAS_SHAPES
    target_shape = {}
    for layer_name in general_shape:
        cur_resolution = int(layer_name.split(".")[0][1:])
        if cur_resolution <= opts["output_size"]:
            target_shape[layer_name] = general_shape[layer_name]
    return target_shape


def _round_up(n, m):
    return ((int(n) + m - 1) // m) * m


# ---------------------------------------------------------------------------
# Pallas kernels
# ---------------------------------------------------------------------------
def _encoder_kernel(x_ref, pw_ref, w_ref, b_ref, o_ref, acc_ref):
    # Fused: bilinear-resize(256,256) -> global mean pool -> linear projection.
    # The resize+mean collapses to a separable weighted pooling, so the 256x256
    # intermediate never exists.  Tiled over the H*W (lane) axis; pooled accumulator
    # lives in VMEM scratch and the tiny (C, D) projection runs on the last step.
    j = pl.program_id(0)

    @pl.when(j == 0)
    def _():
        acc_ref[...] = jnp.zeros_like(acc_ref)

    # (B, C, t) * (1, 1, t) -> lane-axis reduce -> (B, C).
    # TODO(synk): folding B*C onto the sublane axis would improve vreg packing (C=3
    # uses 3/8 sublanes), but only matters once DMA is fully hidden.
    acc_ref[...] += jnp.sum(x_ref[...] * pw_ref[...], axis=2)

    @pl.when(j == pl.num_programs(0) - 1)
    def _():
        o_ref[...] = (
            jnp.dot(acc_ref[...].astype(jnp.bfloat16), w_ref[...],
                    preferred_element_type=jnp.float32)
            + b_ref[...]
        )


def _hyper_kernel(x_ref, w1_ref, b1_ref, w2_ref, b2_ref, o_ref):
    # One hypernetwork head per grid step (Linear -> ReLU -> Linear); the output slab
    # for each head starts at a 128-lane-aligned offset.
    x = x_ref[...].astype(jnp.bfloat16)
    h = jnp.dot(x, w1_ref[...], preferred_element_type=jnp.float32) + b1_ref[...]
    h = jnp.maximum(h, 0.0)
    o_ref[...] = (
        jnp.dot(h.astype(jnp.bfloat16), w2_ref[...],
                preferred_element_type=jnp.float32)
        + b2_ref[...]
    )


def _synthesis_base_kernel(wm_ref, wsyn_ref, bsyn_ref, o_ref):
    # Synthesis stand-in with added_weights=None: zero-pred fast path.
    wm = wm_ref[...].astype(jnp.bfloat16)
    o_ref[...] = (
        jnp.dot(wm, wsyn_ref[...], preferred_element_type=jnp.float32) + bsyn_ref[...]
    )


def _synthesis_delta_kernel(base_ref, pred_ref, wadd_ref, o_ref):
    # Synthesis with predicted ("added") weights: reuse the already-computed base images
    # (no re-streaming of wsyn, no duplicated base matmul) and add the per-sample delta.
    pred = pred_ref[...].astype(jnp.bfloat16)
    delta = jnp.dot(pred, wadd_ref[...], preferred_element_type=jnp.float32)
    o_ref[...] = base_ref[...] + delta


# ---------------------------------------------------------------------------
# Host-side helpers (layout / weight plumbing only)
# ---------------------------------------------------------------------------
def _bilinear_matrix(out_size, in_size):
    # Matches F.interpolate(..., mode='bilinear', align_corners=False).
    scale = in_size / out_size
    i = jnp.arange(out_size, dtype=jnp.float32)
    src = jnp.clip((i + 0.5) * scale - 0.5, 0.0, in_size - 1)
    i0 = jnp.floor(src).astype(jnp.int32)
    i1 = jnp.minimum(i0 + 1, in_size - 1)
    frac = src - i0.astype(jnp.float32)
    rows = jnp.arange(out_size)
    m = jnp.zeros((out_size, in_size), jnp.float32)
    m = m.at[rows, i0].add(1.0 - frac)
    m = m.at[rows, i1].add(frac)
    return m


@functools.lru_cache(maxsize=None)
def _encoder_plan(in_h, in_w):
    """Static per-(H, W) plan: HW lane tile, padded HW, and the padded pooling weights.

    mean over (256,256) of the bilinear-resized plane == weighted sum of the original
    plane with separable weights (column sums of the two bilinear matrices).
    Hoisted out of forward() so the scatter-add construction runs once per shape.
    """
    hw = in_h * in_w
    t = min(_round_up(hw, 128), 16384)     # lane tile keeps the (B, C, t) block small
    hw_pad = _round_up(hw, t)
    ch = jnp.sum(_bilinear_matrix(256, in_h), axis=0)            # (in_h,)
    cw = jnp.sum(_bilinear_matrix(256, in_w), axis=0)            # (in_w,)
    pw = (ch[:, None] * cw[None, :]).reshape(-1) / float(256 * 256)
    pw_pad = jnp.zeros((1, 1, hw_pad), jnp.float32).at[0, 0, :hw].set(pw)
    return t, hw_pad, pw_pad


# ---------------------------------------------------------------------------
# Python wrappers around pallas_call
# ---------------------------------------------------------------------------
def encoder_forward(x, proj_w, proj_b, vmem_limit):
    """Fused (resize-to-256 -> global mean pool -> linear), tiled over the H*W axis."""
    B, C, H, W = x.shape
    t, hw_pad, pw = _encoder_plan(H, W)
    hw = H * W
    xf = x.reshape(B, C, hw)
    if hw_pad != hw:
        xf = jnp.pad(xf, ((0, 0), (0, 0), (0, hw_pad - hw)))
    D = proj_w.shape[1]
    return pl.pallas_call(
        _encoder_kernel,
        out_shape=jax.ShapeDtypeStruct((B, D), jnp.float32),
        grid=(hw_pad // t,),
        in_specs=[
            pl.BlockSpec((B, C, t), lambda j: (0, 0, j)),
            pl.BlockSpec((1, 1, t), lambda j: (0, 0, j)),
            pl.BlockSpec((C, D), lambda j: (0, 0)),
            pl.BlockSpec((1, D), lambda j: (0, 0)),
        ],
        out_specs=pl.BlockSpec((B, D), lambda j: (0, 0)),
        scratch_shapes=[pltpu.VMEM((B, C), jnp.float32)],
        compiler_params=pltpu.CompilerParams(
            dimension_semantics=("arbitrary",), vmem_limit_bytes=vmem_limit),
    )(xf, pw, proj_w, proj_b)


def hypernet_forward(h_in, w1_all, b1_all, w2_all, b2_all, L, hid_pad, pad_max,
                     vmem_limit):
    """All hypernetwork heads, one head per grid step; output slab is 128-lane aligned."""
    B, Din = h_in.shape
    p_pad = L * pad_max
    cost = pl.CostEstimate(
        flops=2 * B * Din * L * hid_pad + 2 * B * L * hid_pad * pad_max,
        transcendentals=0,
        bytes_accessed=int(h_in.size * 4 + w1_all.size * 2 + b1_all.size * 4
                           + w2_all.size * 2 + b2_all.size * 4 + B * p_pad * 4),
    )
    return pl.pallas_call(
        _hyper_kernel,
        out_shape=jax.ShapeDtypeStruct((B, p_pad), jnp.float32),
        grid=(L,),
        in_specs=[
            pl.BlockSpec((B, Din), lambda l: (0, 0)),
            pl.BlockSpec((Din, hid_pad), lambda l: (0, l)),
            pl.BlockSpec((1, hid_pad), lambda l: (0, l)),
            pl.BlockSpec((hid_pad, pad_max), lambda l: (l, 0)),
            pl.BlockSpec((1, pad_max), lambda l: (0, l)),
        ],
        out_specs=pl.BlockSpec((B, pad_max), lambda l: (0, l)),
        compiler_params=pltpu.CompilerParams(
            dimension_semantics=("parallel",), vmem_limit_bytes=vmem_limit),
        cost_estimate=cost,
    )(h_in, w1_all, b1_all, w2_all, b2_all)


def synthesis_base(wm, wsyn, bsyn, tn, vmem_limit):
    """Synthesis with added_weights=None; N-tiled over padded output columns."""
    B, K = wm.shape
    N_pad = wsyn.shape[1]
    cost = pl.CostEstimate(
        flops=2 * B * K * N_pad, transcendentals=0,
        bytes_accessed=int(wm.size * 4 + wsyn.size * 2 + bsyn.size * 4 + B * N_pad * 4),
    )
    return pl.pallas_call(
        _synthesis_base_kernel,
        out_shape=jax.ShapeDtypeStruct((B, N_pad), jnp.float32),
        grid=(N_pad // tn,),
        in_specs=[
            pl.BlockSpec((B, K), lambda j: (0, 0)),
            pl.BlockSpec((K, tn), lambda j: (0, j)),
            pl.BlockSpec((1, tn), lambda j: (0, j)),
        ],
        out_specs=pl.BlockSpec((B, tn), lambda j: (0, j)),
        compiler_params=pltpu.CompilerParams(
            dimension_semantics=("parallel",), vmem_limit_bytes=vmem_limit),
        cost_estimate=cost,
    )(wm, wsyn, bsyn)


def synthesis_delta(base_flat, pred, wadd, tn, vmem_limit):
    """Synthesis with predicted weights: base images re-read, only the delta matmul runs."""
    B, N_pad = base_flat.shape
    P = pred.shape[1]
    cost = pl.CostEstimate(
        flops=2 * B * P * N_pad, transcendentals=0,
        bytes_accessed=int(base_flat.size * 4 + pred.size * 4 + wadd.size * 2
                           + B * N_pad * 4),
    )
    return pl.pallas_call(
        _synthesis_delta_kernel,
        out_shape=jax.ShapeDtypeStruct((B, N_pad), jnp.float32),
        grid=(N_pad // tn,),
        in_specs=[
            pl.BlockSpec((B, tn), lambda j: (0, j)),
            pl.BlockSpec((B, P), lambda j: (0, 0)),
            pl.BlockSpec((P, tn), lambda j: (0, j)),
        ],
        out_specs=pl.BlockSpec((B, tn), lambda j: (0, j)),
        compiler_params=pltpu.CompilerParams(
            dimension_semantics=("parallel",), vmem_limit_bytes=vmem_limit),
        cost_estimate=cost,
    )(base_flat, pred, wadd)


# ---------------------------------------------------------------------------
# HyperInverter (Pallas version)
# ---------------------------------------------------------------------------
class HyperInverterPallas:
    LATENT = 512

    def __init__(self, opts, key):
        self.opts = dict(opts)
        self.opts["n_styles"] = int(math.log(self.opts["output_size"], 2)) * 2 - 2
        self.num_ws = self.opts["n_styles"]
        self.target_shape = get_target_shapes(self.opts)

        latent = self.LATENT
        hidden = int(self.opts["hidden_dim"])
        S = int(self.opts["output_size"])
        N = 3 * S * S

        # Generation-aware VMEM budget (v5e/v6e: 128 MiB physical, v7x: 64 MiB).
        try:
            cap = int(pltpu.get_tpu_info().vmem_capacity_bytes)
        except Exception:  # conservative (v7x-sized) fallback
            cap = 64 * 1024 * 1024
        self.vmem_limit = int(min(cap * 3 // 4, 96 * 1024 * 1024))
        budget = int(self.vmem_limit * 0.6)

        keys = jax.random.split(key, 10)
        kit = iter(keys)

        def init(shape, k, scale=0.02):
            return scale * jax.random.normal(k, shape, dtype=jnp.float32)

        # TODO(synk): the real w_encoder / w_bar_encoder are pretrained IR-SE/ResNet FPN
        # backbones loaded from checkpoints; replaced by (resize->pool->linear) stand-ins.
        w_enc_w = init((3, latent), next(kit))
        w_enc_b = init((1, latent), next(kit))
        w_bar_enc_w = init((3, latent), next(kit))
        w_bar_enc_b = init((1, latent), next(kit))
        # Both encoders applied to x are fused into a single (3, 1024) projection.
        self.enc_both_w = jnp.concatenate([w_enc_w, w_bar_enc_w], axis=1).astype(jnp.bfloat16)
        self.enc_both_b = jnp.concatenate([w_enc_b, w_bar_enc_b], axis=1)
        self.w_bar_enc_w = w_bar_enc_w.astype(jnp.bfloat16)
        self.w_bar_enc_b = w_bar_enc_b

        # TODO(synk): the real decoder is a pretrained StyleGAN2-ADA generator and the
        # discriminator is never used in forward(); replaced by a modulated-linear
        # synthesis stand-in.
        self.latent_avg = init((latent,), next(kit), scale=1.0)

        # Target-layer bookkeeping: every head's flat output occupies a 128-lane-aligned
        # slab of width pad_max so the hypernet grid has uniform block shapes.
        self.layer_names = list(self.target_shape.keys())
        self.layer_sizes = [int(math.prod(self.target_shape[n])) for n in self.layer_names]
        L = len(self.layer_names)
        self.L = L
        self.pad_max = max(_round_up(s, 128) for s in self.layer_sizes)
        self.hid_pad = _round_up(hidden, 128)
        self.p_pad = L * self.pad_max
        self.layer_offsets = [li * self.pad_max for li in range(L)]

        # Synthesis output-column tile derived from the VMEM budget (double-buffered
        # streams + resident small blocks), bounded to 4096 lanes.
        B_BOUND = 8
        per_col_delta = 2 * (self.p_pad * 2 + 2 * B_BOUND * 4)
        per_col_base = 2 * (latent * 2 + 4 + B_BOUND * 4)
        per_col = max(per_col_delta, per_col_base)
        resident = B_BOUND * (latent + self.p_pad) * 4
        avail = max(budget - resident, 128 * per_col)
        tn = (avail // per_col) // 128 * 128
        tn = int(max(128, min(tn, 4096, _round_up(N, 128))))
        self.syn_tn = tn
        self.N = N
        self.N_pad = _round_up(N, tn)     # zero-padded columns keep the grid tiled

        # Synthesis stand-in weights, zero-padded to N_pad output columns.
        # TODO(synk): int8 (v5e/v6e) or fp8 (v7x) quantization of syn_w/add_w would halve
        # the dominant weight-stream HBM traffic; kept bf16 here for simplicity.
        syn_w = jnp.zeros((latent, self.N_pad), jnp.float32).at[:, :N].set(
            init((latent, N), next(kit)))
        syn_b = jnp.zeros((1, self.N_pad), jnp.float32).at[:, :N].set(
            init((1, N), next(kit)))
        self.syn_w = syn_w.astype(jnp.bfloat16)
        self.syn_b = syn_b
        # Rows of add_w at padded pred positions never contribute (pred is exactly 0 there).
        add_w = jnp.zeros((self.p_pad, self.N_pad), jnp.float32).at[:, :N].set(
            init((self.p_pad, N), next(kit)))
        self.add_w = add_w.astype(jnp.bfloat16)

        # Hypernetwork heads (Linear -> ReLU -> Linear), one head per grid step:
        # W1 columns and W2 rows are padded to hid_pad (multiple of 128) per head; the
        # padded hidden units are exact zeros (zero W1 cols, zero b1, zero W2 rows).
        w1_all = jnp.zeros((2 * latent, L * self.hid_pad), jnp.float32)
        b1_all = jnp.zeros((1, L * self.hid_pad), jnp.float32)
        w2_all = jnp.zeros((L * self.hid_pad, self.pad_max), jnp.float32)
        b2_all = jnp.zeros((1, self.p_pad), jnp.float32)
        for li, size in enumerate(self.layer_sizes):
            ks = jax.random.split(jax.random.fold_in(key, 100 + li), 4)
            w1 = init((2 * latent, hidden), ks[0])
            b1 = init((1, hidden), ks[1])
            w2 = init((hidden, size), ks[2])
            b2 = init((1, size), ks[3])
            c0 = li * self.hid_pad
            w1_all = w1_all.at[:, c0:c0 + hidden].set(w1)
            b1_all = b1_all.at[:, c0:c0 + hidden].set(b1)
            w2_all = w2_all.at[c0:c0 + hidden, :size].set(w2)
            b2_all = b2_all.at[:, li * self.pad_max:li * self.pad_max + size].set(b2)
        self.hyper_w1 = w1_all.astype(jnp.bfloat16)
        self.hyper_b1 = b1_all
        self.hyper_w2 = w2_all.astype(jnp.bfloat16)
        self.hyper_b2 = b2_all

    def forward(self, x, return_latents=False):
        bs = x.shape[0]
        S = int(self.opts["output_size"])
        N = self.N
        latent = self.LATENT

        # F.interpolate(x, 256, bilinear) -> encoder(s): one tiled weighted-pool +
        # projection kernel computing BOTH w_encoder and w_bar_encoder outputs at once.
        both = encoder_forward(x, self.enc_both_w, self.enc_both_b, self.vmem_limit)
        w_codes_2d = both[:, :latent] + self.latent_avg[None, :]                 # (B, 512)
        w_bar_codes = both[:, latent:]                                           # (B, 512)

        # Returned latents keep the (B, num_ws, 512) repeat; synthesis uses the (B, 512)
        # codes directly (mean(repeat(x)) == x).
        w_codes = jnp.repeat(w_codes_2d[:, None, :], self.num_ws, axis=1)

        # w_images = decoder.synthesis(w_codes, added_weights=None) — zero-pred fast path.
        base_flat = synthesis_base(w_codes_2d, self.syn_w, self.syn_b,
                                   self.syn_tn, self.vmem_limit)                 # (B, N_pad)
        w_images = base_flat[:, :N].reshape(bs, 3, S, S)

        # w_image_codes = w_bar_encoder(resize(w_images, 256)) — same fused encoder kernel.
        w_image_codes = encoder_forward(w_images, self.w_bar_enc_w, self.w_bar_enc_b,
                                        self.vmem_limit)                         # (B, 512)

        # Hypernetwork: one head per grid step; output slab feeds synthesis directly.
        hyper_in = jnp.concatenate([w_image_codes, w_bar_codes], axis=-1)        # (B, 1024)
        pred_flat = hypernet_forward(hyper_in, self.hyper_w1, self.hyper_b1,
                                     self.hyper_w2, self.hyper_b2,
                                     self.L, self.hid_pad, self.pad_max,
                                     self.vmem_limit)                            # (B, p_pad)

        predicted_weights = {}
        for name, off, size in zip(self.layer_names, self.layer_offsets, self.layer_sizes):
            predicted_weights[name] = pred_flat[:, off:off + size].reshape(
                (bs,) + self.target_shape[name])

        # final_images = per-sample decoder.synthesis(w_code, added_weights): the
        # per-sample python loop of the reference collapses to one batched kernel that
        # REUSES the already-computed base images (no duplicated base matmul).
        final_flat = synthesis_delta(base_flat, pred_flat, self.add_w,
                                     self.syn_tn, self.vmem_limit)               # (B, N_pad)
        final_images = final_flat[:, :N].reshape(bs, 3, S, S)

        return_data = [w_images, final_images, predicted_weights]
        if return_latents:
            return_data.append(w_codes)
        return tuple(return_data)


# ---------------------------------------------------------------------------
if __name__ == "__main__":
    opts = {"output_size": 16, "hidden_dim": 32}
    key = jax.random.PRNGKey(0)
    k_model, k_x = jax.random.split(key)

    model = HyperInverterPallas(opts, k_model)
    x = jax.random.normal(k_x, (2, 3, 16, 16), dtype=jnp.float32)

    w_images, final_images, predicted_weights, w_codes = model.forward(x, return_latents=True)
    jax.block_until_ready(w_images)
    jax.block_until_ready(final_images)
    jax.block_until_ready(w_codes)
    for v in predicted_weights.values():
        jax.block_until_ready(v)

    assert w_images.shape == (2, 3, 16, 16)
    assert final_images.shape == (2, 3, 16, 16)
    assert w_codes.shape == (2, model.num_ws, 512)
    for name, shape in model.target_shape.items():
        assert predicted_weights[name].shape == (2,) + shape

    print("KERNEL_OK")
</pallas_src>

<mosaic_0001>
module attributes {stable_mosaic.version = 11 : i64} {
  func.func @_encoder_kernel(%arg0: i32, %arg1: memref<2x3x256xf32, #tpu.memory_space<vmem>>, %arg2: memref<1x1x256xf32, #tpu.memory_space<vmem>>, %arg3: memref<3x1024xbf16, #tpu.memory_space<vmem>>, %arg4: memref<1x1024xf32, #tpu.memory_space<vmem>>, %arg5: memref<2x1024xf32, #tpu.memory_space<vmem>>, %arg6: memref<2x3xf32, #tpu.memory_space<vmem>>) attributes {dimension_semantics = [#tpu.dimension_semantics<arbitrary>], iteration_bounds = array<i64: 1>, scalar_prefetch = 0 : i64, scratch_operands = 1 : i64, tpu.core_type = #tpu.core_type<tc>, window_params = [{transform_indices = @transform_0, window_bounds = array<i64: 2, 3, 256>}, {transform_indices = @transform_1, window_bounds = array<i64: 1, 1, 256>}, {pipeline_mode = #tpu.pipeline_mode<synchronous>, transform_indices = @transform_2, window_bounds = array<i64: 3, 1024>}, {pipeline_mode = #tpu.pipeline_mode<synchronous>, transform_indices = @transform_3, window_bounds = array<i64: 1, 1024>}, {pipeline_mode = #tpu.pipeline_mode<synchronous>, transform_indices = @transform_4, window_bounds = array<i64: 2, 1024>}]} {
    %c0_i32 = arith.constant 0 : i32
    %0 = arith.cmpi eq, %arg0, %c0_i32 : i32
    %1 = arith.extui %0 : i1 to i32
    %c0_i32_0 = arith.constant 0 : i32
    %2 = arith.cmpi ne, %1, %c0_i32_0 : i32
    scf.if %2 {
      %cst_12 = arith.constant 0.000000e+00 : f32
      %14 = vector.broadcast %cst_12 : f32 to vector<2x3xf32>
      %c0_13 = arith.constant 0 : index
      %c0_14 = arith.constant 0 : index
      %15 = vector.load %arg6[%c0_13, %c0_14] : memref<2x3xf32, #tpu.memory_space<vmem>>, vector<2x3xf32>
      tpu.vector_store %arg6[%c0_13, %c0_14], %14 {strides = array<i32>} : memref<2x3xf32, #tpu.memory_space<vmem>>, vector<2x3xf32>,
    } else {
    }
    %c0 = arith.constant 0 : index
    %c0_1 = arith.constant 0 : index
    %3 = vector.load %arg6[%c0, %c0_1] : memref<2x3xf32, #tpu.memory_space<vmem>>, vector<2x3xf32>
    %c0_2 = arith.constant 0 : index
    %c0_3 = arith.constant 0 : index
    %c0_4 = arith.constant 0 : index
    %4 = vector.load %arg1[%c0_2, %c0_3, %c0_4] : memref<2x3x256xf32, #tpu.memory_space<vmem>>, vector<2x3x256xf32>
    %c0_5 = arith.constant 0 : index
    %c0_6 = arith.constant 0 : index
    %c0_7 = arith.constant 0 : index
    %5 = vector.load %arg2[%c0_5, %c0_6, %c0_7] : memref<1x1x256xf32, #tpu.memory_space<vmem>>, vector<1x1x256xf32>
    %6 = vector.broadcast %5 : vector<1x1x256xf32> to vector<2x3x256xf32>
    %7 = arith.mulf %4, %6 : vector<2x3x256xf32>
    %cst = arith.constant dense<0.000000e+00> : vector<2x3xf32>
    %8 = vector.multi_reduction <add>, %7, %cst [2] : vector<2x3x256xf32> to vector<2x3xf32>
    %9 = arith.addf %3, %8 : vector<2x3xf32>
    %c0_8 = arith.constant 0 : index
    %c0_9 = arith.constant 0 : index
    %10 = vector.load %arg6[%c0_8, %c0_9] : memref<2x3xf32, #tpu.memory_space<vmem>>, vector<2x3xf32>
    tpu.vector_store %arg6[%c0_8, %c0_9], %9 {strides = array<i32>} : memref<2x3xf32, #tpu.memory_space<vmem>>, vector<2x3xf32>,
    %c0_i32_10 = arith.constant 0 : i32
    %11 = arith.cmpi eq, %arg0, %c0_i32_10 : i32
    %12 = arith.extui %11 : i1 to i32
    %c0_i32_11 = arith.constant 0 : i32
    %13 = arith.cmpi ne, %12, %c0_i32_11 : i32
    scf.if %13 {
      %c0_12 = arith.constant 0 : index
      %c0_13 = arith.constant 0 : index
      %14 = vector.load %arg6[%c0_12, %c0_13] : memref<2x3xf32, #tpu.memory_space<vmem>>, vector<2x3xf32>
      %15 = arith.truncf %14 : vector<2x3xf32> to vector<2x3xbf16>
      %c0_14 = arith.constant 0 : index
      %c0_15 = arith.constant 0 : index
      %16 = vector.load %arg3[%c0_14, %c0_15] : memref<3x1024xbf16, #tpu.memory_space<vmem>>, vector<3x1024xbf16>
      %cst_16 = arith.constant dense<0.000000e+00> : vector<2x1024xf32>
      %17 = tpu.matmul %15, %16, %cst_16 {dimension_numbers = #tpu.dot_dimension_numbers<[1], [0], [0], [1], [0, 0, 1, 1], [], []>} : vector<2x3xbf16>, vector<3x1024xbf16>, vector<2x1024xf32> -> vector<2x1024xf32>
      %c0_17 = arith.constant 0 : index
      %c0_18 = arith.constant 0 : index
      %18 = vector.load %arg4[%c0_17, %c0_18] : memref<1x1024xf32, #tpu.memory_space<vmem>>, vector<1x1024xf32>
      %19 = vector.broadcast %18 : vector<1x1024xf32> to vector<2x1024xf32>
      %20 = arith.addf %17, %19 : vector<2x1024xf32>
      %c0_19 = arith.constant 0 : index
      %c0_20 = arith.constant 0 : index
      %21 = vector.load %arg5[%c0_19, %c0_20] : memref<2x1024xf32, #tpu.memory_space<vmem>>, vector<2x1024xf32>
      tpu.vector_store %arg5[%c0_19, %c0_20], %20 {strides = array<i32>} : memref<2x1024xf32, #tpu.memory_space<vmem>>, vector<2x1024xf32>,
    } else {
    }
    return
  }
  func.func @transform_0(%arg0: i32) -> (i32, i32, i32) {
    %c0_i32 = arith.constant 0 : i32
    %c0_i32_0 = arith.constant 0 : i32
    %c0_i32_1 = arith.constant 0 : i32
    return %c0_i32, %c0_i32_0, %arg0 : i32, i32, i32
  }
  func.func @transform_1(%arg0: i32) -> (i32, i32, i32) {
    %c0_i32 = arith.constant 0 : i32
    %c0_i32_0 = arith.constant 0 : i32
    %c0_i32_1 = arith.constant 0 : i32
    return %c0_i32, %c0_i32_0, %arg0 : i32, i32, i32
  }
  func.func @transform_2(%arg0: i32) -> (i32, i32) {
    %c0_i32 = arith.constant 0 : i32
    %c0_i32_0 = arith.constant 0 : i32
    %c0_i32_1 = arith.constant 0 : i32
    return %c0_i32, %c0_i32_0 : i32, i32
  }
  func.func @transform_3(%arg0: i32) -> (i32, i32) {
    %c0_i32 = arith.constant 0 : i32
    %c0_i32_0 = arith.constant 0 : i32
    %c0_i32_1 = arith.constant 0 : i32
    return %c0_i32, %c0_i32_0 : i32, i32
  }
  func.func @transform_4(%arg0: i32) -> (i32, i32) {
    %c0_i32 = arith.constant 0 : i32
    %c0_i32_0 = arith.constant 0 : i32
    %c0_i32_1 = arith.constant 0 : i32
    return %c0_i32, %c0_i32_0 : i32, i32
  }
}

</mosaic_0001>

<llo_original>
// kernel: tpu_custom_call.1
$region0: #{tpu_custom_call.1}
  #allocation0 [shape = 'u32[]', space=smem, size = 0x4, offset = 0x4, fixed_abs, tag = 'smem constant byte address 0x4 - core index']
  #allocation1 [shape = 'u32[144,128]{1,0:T(1,128)}', space=vmem, size = 0x12000, scoped, tag = 'internal scratch']
  #allocation2 [shape = 'f32[2,3]{1,0:T(2,128)}', space=vmem, size = 0x400, scoped, tag = 'scratch operand']
  %s0 = inlined_call_operand.vmem [shape: f32[2,3,256], index: 0, kind: input, shape index: {}]
  %s1 = inlined_call_operand.vmem [shape: f32[1,1,256], index: 1, kind: input, shape index: {}]
  %s2 = inlined_call_operand.vmem [shape: bf16[3,1024], index: 2, kind: input, shape index: {}]
  %s3 = inlined_call_operand.vmem [shape: f32[1,1024], index: 3, kind: input, shape index: {}]
  %s4 = inlined_call_operand.hbm [shape: f32[2,1024], index: 4, kind: output, shape index: {}]
  %s5 = sld [smem:[#allocation0]]
  $region34: #{tpu_custom_call.1} parent=0
    _
  %s7 = ssub.s32 1, %s5
  %s8 = scalar_select 0, %s7, %s5
  $region1: #{tpu_custom_call.1} parent=0
    #allocation3 [shape = 'u8[8192]{0}', space=vmem, size = 0x2000, scoped, tag = 'output window, operand 0, single buffered']
    #allocation4 [shape = 's32[1]{0}', space=sflag, size = 0x4, scoped, tag = 'scoped memory for tpu_custom_call.1']
    %9 = vsyncpa [#allocation4], 0
    // Predicated region
    $region2: #{tpu_custom_call.1} parent=1 // pred_check
      _
    $region3: #{tpu_custom_call.1} parent=1 // pred_check_branch
      %11 = sbr.rel (0) target = $region5
    $region4: #{tpu_custom_call.1} parent=1 // pred_region
      _
    $region5: #{tpu_custom_call.1} parent=1 // pred_fallthru
      _
    // Predicated region
    $region6: #{tpu_custom_call.1} parent=1 // pred_check
      _
    $region7: #{tpu_custom_call.1} parent=1 // pred_check_branch
      %13 = sbr.rel (0) target = $region9
    $region8: #{tpu_custom_call.1} parent=1 // pred_region
      _
    $region9: #{tpu_custom_call.1} parent=1 // pred_fallthru
      _
    // Predicated region
    $region10: #{tpu_custom_call.1} parent=1 // pred_check
      _
    $region11: #{tpu_custom_call.1} parent=1 // pred_check_branch
      %15 = sbr.rel (0) target = $region13
    $region12: #{tpu_custom_call.1} parent=1 // pred_region
      _
    $region13: #{tpu_custom_call.1} parent=1 // pred_fallthru
      _
    // Predicated region
    $region14: #{tpu_custom_call.1} parent=1 // pred_check
      _
    $region15: #{tpu_custom_call.1} parent=1 // pred_check_branch
      %17 = sbr.rel (0) target = $region17
    $region16: #{tpu_custom_call.1} parent=1 // pred_region
      _
    $region17: #{tpu_custom_call.1} parent=1 // pred_fallthru
      _
    %p19 = scmp.eq.s32.totalorder 0, 0
    // Predicated region
    $region18: #{tpu_custom_call.1} parent=1 // pred_check
      %p20 = pneg %p19
    $region19: #{tpu_custom_call.1} parent=1 // pred_check_branch
      %22 = sbr.rel (%p20) target = $region21
    $region20: #{tpu_custom_call.1} parent=1 // pred_region
      %vm23 = vcmask 17408
      %24 = vst.msk [vmem:[#allocation2] sm:$0x3] %vm23, 0.0
    $region21: #{tpu_custom_call.1} parent=1 // pred_fallthru
      _
    %v25 = vld [vmem:[#allocation2] sm:$0x3]
    %v26 = vld [vmem:[%s0] sm:$0x77]
    %v27 = vld [vmem:[%s0 + $0x8] sm:$0x77]
    %v28 = vld [vmem:[%s1] sm:$0x3]
    %v30 = vlaneseq
    %v31 = vshrl.u32 %v30, 7
    %v32 = vsub.s32 0, %v31
    %v33 = vrot.slane %v28, %v32
    %v34 = vlaneseq
    %v35 = vshrl.u32 %v34, 7
    %v36 = vsub.s32 1, %v35
    %v37 = vrot.slane %v28, %v36
    %v38 = vcombine.low %v33, %v37
    %v40 = vmul.f32 %v26, %v38
    %v41 = vmul.f32 %v27, %v38
    %v44 = vcombine.high %v40, %v40
    %v45 = vcombine.high %v41, %v41
    %vm48 = vcmask 1042432
    %v49 = vsel %vm48, %v40, 0.0
    %v50 = vsel %vm48, %v44, 0.0
    %v51 = vadd.f32 %v49, %v50
    %52 = vadd.xlane.f32.xlu0 %v51
    %v53 = vpop.xlane.xlu0 %52
    %v54 = vsel %vm48, %v41, 0.0
    %v55 = vsel %vm48, %v45, 0.0
    %v56 = vadd.f32 %v54, %v55
    %57 = vadd.xlane.f32.xlu0 %v56
    %v58 = vpop.xlane.xlu0 %57
    %v61 = vlaneseq
    %v62 = vand.u32 %v61, 127
    %v63 = vlaneseq
    %v64 = vshrl.u32 %v63, 7
    %v65 = vsub.s32 %v62, %v64
    %v66 = vrot.slane %v53, %v65
    %v67 = vlaneseq
    %v68 = vshrl.u32 %v67, 7
    %v69 = vsub.s32 %v62, %v68
    %v70 = vrot.slane %v58, %v69
    %vm71 = vcmask 1041409
    %v72 = vsel %vm71, %v70, %v66
    %v74 = vadd.f32 %v25, %v72
    %vm75 = vcmask 17408
    %76 = vst.msk [vmem:[#allocation2] sm:$0x3] %vm75, %v74
    // Predicated region
    $region22: #{tpu_custom_call.1} parent=1 // pred_check
      %p77 = pneg %p19
    $region23: #{tpu_custom_call.1} parent=1 // pred_check_branch
      %79 = sbr.rel (%p77) target = $region25
    $region24: #{tpu_custom_call.1} parent=1 // pred_region
      %v80 = vld [vmem:[#allocation2] sm:$0x3]
      %v81 = vpack.c.bf16 %v80, %v80
      %v82 = vld [vmem:[%s2] sm:$0xff]
      %v83 = vld [vmem:[%s2 + $0x8] sm:$0xff]
      %v84 = vld [vmem:[%s3] sm:$0xff]
      %v86 = vlaneseq
      %v87 = vshrl.u32 %v86, 7
      %v88 = vsub.s32 0, %v87
      %v89 = vrot.slane %v84, %v88
      %v90 = vlaneseq
      %v91 = vshrl.u32 %v90, 7
      %v92 = vsub.s32 1, %v91
      %v93 = vrot.slane %v84, %v92
      %v94 = vlaneseq
      %v95 = vshrl.u32 %v94, 7
      %v96 = vsub.s32 2, %v95
      %v97 = vrot.slane %v84, %v96
      %v98 = vlaneseq
      %v99 = vshrl.u32 %v98, 7
      %v100 = vsub.s32 3, %v99
      %v101 = vrot.slane %v84, %v100
      %v102 = vlaneseq
      %v103 = vshrl.u32 %v102, 7
      %v104 = vsub.s32 4, %v103
      %v105 = vrot.slane %v84, %v104
      %v106 = vlaneseq
      %v107 = vshrl.u32 %v106, 7
      %v108 = vsub.s32 5, %v107
      %v109 = vrot.slane %v84, %v108
      %v110 = vlaneseq
      %v111 = vshrl.u32 %v110, 7
      %v112 = vsub.s32 6, %v111
      %v113 = vrot.slane %v84, %v112
      %v114 = vlaneseq
      %v115 = vshrl.u32 %v114, 7
      %v116 = vsub.s32 7, %v115
      %v117 = vrot.slane %v84, %v116
      %v128 = vcombine.high %v82, %v82
      %v130 = vunpack.c.l.s4 1983009808
      %v131 = vunpack.c.0.s8 %v130
      %v132 = vlaneseq
      %v133 = vshrl.u32 %v132, 7
      %v134 = vsub.s32 %v131, %v133
      %v135 = vrot.slane %v82, %v134
      %v137 = vunpack.c.l.s4 1983009808
      %v138 = vunpack.c.0.s8 %v137
      %v139 = vlaneseq
      %v140 = vshrl.u32 %v139, 7
      %v141 = vsub.s32 %v138, %v140
      %v142 = vrot.slane %v128, %v141
      %v143 = vcombine.high %v135, %v135
      %v144 = vcombine.high %v142, %v142
      %v145 = vcombine.high %v83, %v83
      %v147 = vunpack.c.l.s4 1983009808
      %v148 = vunpack.c.0.s8 %v147
      %v149 = vlaneseq
      %v150 = vshrl.u32 %v149, 7
      %v151 = vsub.s32 %v148, %v150
      %v152 = vrot.slane %v83, %v151
      %v154 = vunpack.c.l.s4 1983009808
      %v155 = vunpack.c.0.s8 %v154
      %v156 = vlaneseq
      %v157 = vshrl.u32 %v156, 7
      %v158 = vsub.s32 %v155, %v157
      %v159 = vrot.slane %v145, %v158
      %v160 = vcombine.high %v152, %v152
      %v161 = vcombine.high %v159, %v159
      %vm162 = vcmask 23552
      %v164 = vsel %vm162, %v81, 0
      %vm166 = vcmask 1040384
      %vm167 = vcmask 1041408
      %v168 = vsel %vm166, 4294967295, 65535
      %v169 = vsel %vm167, %v168, 0
      %v171 = vand.u32 %v135, %v169
      %v174 = vand.u32 %v143, %v169
      %v177 = vand.u32 %v142, %v169
      %v180 = vand.u32 %v144, %v169
      %v183 = vand.u32 %v152, %v169
      %v186 = vand.u32 %v160, %v169
      %v189 = vand.u32 %v159, %v169
      %v192 = vand.u32 %v161, %v169
      %194 = vmatprep.subr.bf16.mxu0 %v174
      %195 = vmatpush1.bf16.msra.mxu0 %v171
      %196 = vmatprep.subr.bf16.mxu0 0
      %197 = vmatpush1.bf16.msra.mxu0 0
      %198 = vmatprep.subr.bf16.mxu0 0
      %199 = vmatpush1.bf16.msra.mxu0 0
      %200 = vmatprep.subr.bf16.mxu0 0
      %201 = vmatpush1.bf16.msra.mxu0 0
      %202 = vmatprep.subr.bf16.mxu0 0
      %203 = vmatpush1.bf16.msra.mxu0 0
      %204 = vmatprep.subr.bf16.mxu0 0
      %205 = vmatpush1.bf16.msra.mxu0 0
      %206 = vmatprep.subr.bf16.mxu0 0
      %207 = vmatpush1.bf16.msra.mxu0 0
      %208 = vmatprep.subr.bf16.mxu0 0
      %209 = vmatpush1.bf16.msra.mxu0 0
      %210 = vmatprep.subr.bf16.mxu0 0
      %211 = vmatpush1.bf16.msra.mxu0 0
      %212 = vmatprep.subr.bf16.mxu0 0
      %213 = vmatpush1.bf16.msra.mxu0 0
      %214 = vmatprep.subr.bf16.mxu0 0
      %215 = vmatpush1.bf16.msra.mxu0 0
      %216 = vmatprep.subr.bf16.mxu0 0
      %217 = vmatpush1.bf16.msra.mxu0 0
      %218 = vmatprep.subr.bf16.mxu0 0
      %219 = vmatpush1.bf16.msra.mxu0 0
      %220 = vmatprep.subr.bf16.mxu0 0
      %221 = vmatpush1.bf16.msra.mxu0 0
      %222 = vmatprep.subr.bf16.mxu0 0
      %223 = vmatpush1.bf16.msra.mxu0 0
      %224 = vmatprep.subr.bf16.mxu0 0
      %225 = vmatpush1.bf16.msra.mxu0 0
      %226 = vmatprep.mubr.bf16.mxu0 0
      %227 = vmatmul.mubr.bf16.gmra.mrb[0].mxu0 %v164
      %v228 = vpop.f32.mrb[0].mxu0
      %v229 = vadd.f32 %v89, %v228
      %v230 = vpop.f32.mrb[0].mxu0
      %v231 = vadd.f32 %v93, %v230
      %v232 = vpop.f32.mrb[0].mxu0
      %v233 = vpop.f32.mrb[0].mxu0
      %234 = vdwg.mxu0
      %235 = vmatprep.subr.bf16.mxu0 %v180
      %236 = vmatpush1.bf16.msra.mxu0 %v177
      %237 = vmatprep.subr.bf16.mxu0 0
      %238 = vmatpush1.bf16.msra.mxu0 0
      %239 = vmatprep.subr.bf16.mxu0 0
      %240 = vmatpush1.bf16.msra.mxu0 0
      %241 = vmatprep.subr.bf16.mxu0 0
      %242 = vmatpush1.bf16.msra.mxu0 0
      %243 = vmatprep.subr.bf16.mxu0 0
      %244 = vmatpush1.bf16.msra.mxu0 0
      %245 = vmatprep.subr.bf16.mxu0 0
      %246 = vmatpush1.bf16.msra.mxu0 0
      %247 = vmatprep.subr.bf16.mxu0 0
      %248 = vmatpush1.bf16.msra.mxu0 0
      %249 = vmatprep.subr.bf16.mxu0 0
      %250 = vmatpush1.bf16.msra.mxu0 0
      %251 = vmatprep.subr.bf16.mxu0 0
      %252 = vmatpush1.bf16.msra.mxu0 0
      %253 = vmatprep.subr.bf16.mxu0 0
      %254 = vmatpush1.bf16.msra.mxu0 0
      %255 = vmatprep.subr.bf16.mxu0 0
      %256 = vmatpush1.bf16.msra.mxu0 0
      %257 = vmatprep.subr.bf16.mxu0 0
      %258 = vmatpush1.bf16.msra.mxu0 0
      %259 = vmatprep.subr.bf16.mxu0 0
      %260 = vmatpush1.bf16.msra.mxu0 0
      %261 = vmatprep.subr.bf16.mxu0 0
      %262 = vmatpush1.bf16.msra.mxu0 0
      %263 = vmatprep.subr.bf16.mxu0 0
      %264 = vmatpush1.bf16.msra.mxu0 0
      %265 = vmatprep.subr.bf16.mxu0 0
      %266 = vmatpush1.bf16.msra.mxu0 0
      %267 = vmatprep.mubr.bf16.mxu0 0
      %268 = vmatmul.mubr.bf16.gmra.mrb[0].mxu0 %v164
      %v269 = vpop.f32.mrb[0].mxu0
      %v270 = vadd.f32 %v97, %v269
      %v271 = vpop.f32.mrb[0].mxu0
      %v272 = vadd.f32 %v101, %v271
      %v273 = vpop.f32.mrb[0].mxu0
      %v274 = vpop.f32.mrb[0].mxu0
      %275 = vdwg.mxu0
      %276 = vmatprep.subr.bf16.mxu0 %v186
      %277 = vmatpush1.bf16.msra.mxu0 %v183
      %278 = vmatprep.subr.bf16.mxu0 0
      %279 = vmatpush1.bf16.msra.mxu0 0
      %280 = vmatprep.subr.bf16.mxu0 0
      %281 = vmatpush1.bf16.msra.mxu0 0
      %282 = vmatprep.subr.bf16.mxu0 0
      %283 = vmatpush1.bf16.msra.mxu0 0
      %284 = vmatprep.subr.bf16.mxu0 0
      %285 = vmatpush1.bf16.msra.mxu0 0
      %286 = vmatprep.subr.bf16.mxu0 0
      %287 = vmatpush1.bf16.msra.mxu0 0
      %288 = vmatprep.subr.bf16.mxu0 0
      %289 = vmatpush1.bf16.msra.mxu0 0
      %290 = vmatprep.subr.bf16.mxu0 0
      %291 = vmatpush1.bf16.msra.mxu0 0
      %292 = vmatprep.subr.bf16.mxu0 0
      %293 = vmatpush1.bf16.msra.mxu0 0
      %294 = vmatprep.subr.bf16.mxu0 0
      %295 = vmatpush1.bf16.msra.mxu0 0
      %296 = vmatprep.subr.bf16.mxu0 0
      %297 = vmatpush1.bf16.msra.mxu0 0
      %298 = vmatprep.subr.bf16.mxu0 0
      %299 = vmatpush1.bf16.msra.mxu0 0
      %300 = vmatprep.subr.bf16.mxu0 0
      %301 = vmatpush1.bf16.msra.mxu0 0
      %302 = vmatprep.subr.bf16.mxu0 0
      %303 = vmatpush1.bf16.msra.mxu0 0
      %304 = vmatprep.subr.bf16.mxu0 0
      %305 = vmatpush1.bf16.msra.mxu0 0
      %306 = vmatprep.subr.bf16.mxu0 0
      %307 = vmatpush1.bf16.msra.mxu0 0
      %308 = vmatprep.mubr.bf16.mxu0 0
      %309 = vmatmul.mubr.bf16.gmra.mrb[0].mxu0 %v164
      %v310 = vpop.f32.mrb[0].mxu0
      %v311 = vadd.f32 %v105, %v310
      %v312 = vpop.f32.mrb[0].mxu0
      %v313 = vadd.f32 %v109, %v312
      %v314 = vpop.f32.mrb[0].mxu0
      %v315 = vpop.f32.mrb[0].mxu0
      %316 = vdwg.mxu0
      %317 = vmatprep.subr.bf16.mxu0 %v192
      %318 = vmatpush1.bf16.msra.mxu0 %v189
      %319 = vmatprep.subr.bf16.mxu0 0
      %320 = vmatpush1.bf16.msra.mxu0 0
      %321 = vmatprep.subr.bf16.mxu0 0
      %322 = vmatpush1.bf16.msra.mxu0 0
      %323 = vmatprep.subr.bf16.mxu0 0
      %324 = vmatpush1.bf16.msra.mxu0 0
      %325 = vmatprep.subr.bf16.mxu0 0
      %326 = vmatpush1.bf16.msra.mxu0 0
      %327 = vmatprep.subr.bf16.mxu0 0
      %328 = vmatpush1.bf16.msra.mxu0 0
      %329 = vmatprep.subr.bf16.mxu0 0
      %330 = vmatpush1.bf16.msra.mxu0 0
      %331 = vmatprep.subr.bf16.mxu0 0
      %332 = vmatpush1.bf16.msra.mxu0 0
      %333 = vmatprep.subr.bf16.mxu0 0
      %334 = vmatpush1.bf16.msra.mxu0 0
      %335 = vmatprep.subr.bf16.mxu0 0
      %336 = vmatpush1.bf16.msra.mxu0 0
      %337 = vmatprep.subr.bf16.mxu0 0
      %338 = vmatpush1.bf16.msra.mxu0 0
      %339 = vmatprep.subr.bf16.mxu0 0
      %340 = vmatpush1.bf16.msra.mxu0 0
      %341 = vmatprep.subr.bf16.mxu0 0
      %342 = vmatpush1.bf16.msra.mxu0 0
      %343 = vmatprep.subr.bf16.mxu0 0
      %344 = vmatpush1.bf16.msra.mxu0 0
      %345 = vmatprep.subr.bf16.mxu0 0
      %346 = vmatpush1.bf16.msra.mxu0 0
      %347 = vmatprep.subr.bf16.mxu0 0
      %348 = vmatpush1.bf16.msra.mxu0 0
      %349 = vmatprep.mubr.bf16.mxu0 0
      %350 = vmatmul.mubr.bf16.gmra.mrb[0].mxu0 %v164
      %v351 = vpop.f32.mrb[0].mxu0
      %v352 = vadd.f32 %v113, %v351
      %v353 = vpop.f32.mrb[0].mxu0
      %v354 = vadd.f32 %v117, %v353
      %v355 = vpop.f32.mrb[0].mxu0
      %v356 = vpop.f32.mrb[0].mxu0
      %357 = vdwg.mxu0
      %v366 = vcombine.low %v229, %v231
      %v367 = vcombine.low %v270, %v272
      %v369 = vunpack.c.l.s4 1983009808
      %v370 = vunpack.c.0.s8 %v369
      %v371 = vlaneseq
      %v372 = vshrl.u32 %v371, 7
      %v373 = vsub.s32 %v370, %v372
      %v374 = vrot.slane %v366, %v373
      %v376 = vunpack.c.l.s4 1983009808
      %v377 = vunpack.c.0.s8 %v376
      %v378 = vlaneseq
      %v379 = vshrl.u32 %v378, 7
      %v380 = vsub.s32 %v377, %v379
      %v381 = vrot.slane %v367, %v380
      %v382 = vcombine.low %v374, %v381
      %v383 = vcombine.low %v311, %v313
      %v384 = vcombine.low %v352, %v354
      %v386 = vunpack.c.l.s4 1983009808
      %v387 = vunpack.c.0.s8 %v386
      %v388 = vlaneseq
      %v389 = vshrl.u32 %v388, 7
      %v390 = vsub.s32 %v387, %v389
      %v391 = vrot.slane %v383, %v390
      %v393 = vunpack.c.l.s4 1983009808
      %v394 = vunpack.c.0.s8 %v393
      %v395 = vlaneseq
      %v396 = vshrl.u32 %v395, 7
      %v397 = vsub.s32 %v394, %v396
      %v398 = vrot.slane %v384, %v397
      %v399 = vcombine.low %v391, %v398
      %402 = vst [vmem:[#allocation3] sm:$0xff] %v382
      %403 = vst [vmem:[#allocation3 + $0x8] sm:$0xff] %v399
    $region25: #{tpu_custom_call.1} parent=1 // pred_fallthru
      _
    // Predicated region
    $region26: #{tpu_custom_call.1} parent=1 // pred_check
      _
    $region27: #{tpu_custom_call.1} parent=1 // pred_check_branch
      %405 = sbr.rel (0) target = $region29
    $region28: #{tpu_custom_call.1} parent=1 // pred_region
      %s407 = ssub.s32 256, 256
      %408 = vsyncadd [#allocation4], %s407
      %s410 = sshll.u32 [#allocation3], 4
      %s411 = int_to_ptr.vmem [resolvable:$true] %s410
      %413 = dma.vmem_to_hbm [thread:$0]  %s411, 256, %s4, [#allocation4]
    $region29: #{tpu_custom_call.1} parent=1 // pred_fallthru
      _
    // Predicated region
    $region30: #{tpu_custom_call.1} parent=1 // pred_check
      _
    $region31: #{tpu_custom_call.1} parent=1 // pred_check_branch
      %415 = sbr.rel (0) target = $region33
    $region32: #{tpu_custom_call.1} parent=1 // pred_region
      %416 = dma.done [#allocation4], 256
    $region33: #{tpu_custom_call.1} parent=1 // pred_fallthru
      _
    %417 = vsyncpa [#allocation4], 1

</llo_original>
